<compile_context>
chip_gen: v5e
topology: v5e:2x2
jax: 0.10.0
libtpu: 0.0.40
codegen_flags: <defaults>
</compile_context>

<pallas_src>
import jax
import jax.numpy as jnp
import numpy as np
from jax.experimental import pallas as pl
from jax.experimental.pallas import tpu as pltpu

_INV_SQRT2 = 0.7071067811865476
_EPS = 1e-5


def _feature_aliasing_kernel(xcol_ref, w_ref, b_ref, g_ref, beta_ref, o_ref):
    # xcol_ref: (1, 9C, HW)  im2col'd input for one batch element (lane dim = HW)
    # w_ref:    (C, 9C)      folded conv weight
    # b_ref:    (C, 1)       conv bias
    # g_ref:    (C, 1)       groupnorm gamma
    # beta_ref: (C, 1)       groupnorm beta
    # o_ref:    (1, C, HW)   output slab (lane-dense, HW multiple of 128)
    x = xcol_ref[0]                                               # (9C, HW)

    # Conv as a single fused matmul, f32 accumulation on the MXU.
    acc = jnp.dot(w_ref[...], x, preferred_element_type=jnp.float32)   # (C, HW)
    acc = acc + b_ref[...].astype(jnp.float32)                    # (C,1) broadcast

    # GroupNorm(1 group): stats over the whole (C, HW) sample, single pass.
    n = acc.size
    s = jnp.sum(acc)
    ss = jnp.sum(acc * acc)
    mean = s / n
    var = jnp.maximum(ss / n - mean * mean, 0.0)
    inv_std = jax.lax.rsqrt(var + _EPS)

    # Fused per-channel scale + shift.
    scale = g_ref[...].astype(jnp.float32) * inv_std              # (C, 1)
    shift = beta_ref[...].astype(jnp.float32) - mean * scale      # (C, 1)
    y = acc * scale + shift

    # Exact (erf-based) GELU, matching torch.nn.GELU() default.
    y = 0.5 * y * (1.0 + jax.lax.erf(y * _INV_SQRT2))

    o_ref[0] = y.astype(o_ref.dtype)


@jax.jit
def feature_aliasing(x_nchw, conv_w, conv_b, gamma, beta):
    """x_nchw: (B, C, H, W) float32. conv_w: (Cout, Cin, 3, 3) PyTorch layout."""
    B, C, H, W = x_nchw.shape
    HW = H * W

    # --- wrapper-side layout plumbing (keeps the kernel lane-dense) ---
    # Pad spatially, then im2col the 9 taps: row index = (kh*3+kw)*C + ci.
    xp = jnp.pad(x_nchw, ((0, 0), (0, 0), (1, 1), (1, 1)))        # (B, C, H+2, W+2)
    taps = [xp[:, :, kh:kh + H, kw:kw + W] for kh in range(3) for kw in range(3)]
    x_col = jnp.stack(taps, axis=1).reshape(B, 9 * C, HW)         # (B, 9C, HW)

    # Fold conv weight to (Cout, 9*Cin) with matching column index.
    w_mat = jnp.transpose(conv_w, (0, 2, 3, 1)).reshape(C, 9 * C)  # (C, 9C)
    b2 = conv_b.reshape(C, 1)
    g2 = gamma.reshape(C, 1)
    be2 = beta.reshape(C, 1)

    out = pl.pallas_call(
        _feature_aliasing_kernel,
        out_shape=jax.ShapeDtypeStruct((B, C, HW), x_nchw.dtype),
        grid_spec=pltpu.PrefetchScalarGridSpec(
            num_scalar_prefetch=0,
            grid=(B,),
            in_specs=[
                pl.BlockSpec((1, 9 * C, HW), lambda bi: (bi, 0, 0)),
                pl.BlockSpec((C, 9 * C), lambda bi: (0, 0)),
                pl.BlockSpec((C, 1), lambda bi: (0, 0)),
                pl.BlockSpec((C, 1), lambda bi: (0, 0)),
                pl.BlockSpec((C, 1), lambda bi: (0, 0)),
            ],
            out_specs=pl.BlockSpec((1, C, HW), lambda bi: (bi, 0, 0)),
        ),
        compiler_params=pltpu.CompilerParams(
            dimension_semantics=("parallel",),
            vmem_limit_bytes=32 * 1024 * 1024,   # explicit, portable across v5e/v6e/v7x
        ),
    )(x_col, w_mat, b2, g2, be2)

    # Channel-major layout means the output is already NCHW after a reshape.
    return out.reshape(B, C, H, W)


def _reference(x_nchw, conv_w, conv_b, gamma, beta):
    """Plain-JAX reference mirroring the PyTorch module."""
    y = jax.lax.conv_general_dilated(
        x_nchw, conv_w, window_strides=(1, 1), padding=((1, 1), (1, 1)),
        dimension_numbers=("NCHW", "OIHW", "NCHW"),
    ) + conv_b.reshape(1, -1, 1, 1)
    mean = jnp.mean(y, axis=(1, 2, 3), keepdims=True)
    var = jnp.mean((y - mean) ** 2, axis=(1, 2, 3), keepdims=True)
    y = (y - mean) * jax.lax.rsqrt(var + _EPS)
    y = y * gamma.reshape(1, -1, 1, 1) + beta.reshape(1, -1, 1, 1)
    return 0.5 * y * (1.0 + jax.lax.erf(y * _INV_SQRT2))


if __name__ == "__main__":
    B, C, H, W = 2, 4, 16, 16
    key = jax.random.PRNGKey(0)
    kx, kw, kb = jax.random.split(key, 3)

    x = jax.random.normal(kx, (B, C, H, W), dtype=jnp.float32)
    # Deterministic synthetic parameters (PyTorch-like fan-in scaling for conv).
    fan_in = C * 3 * 3
    conv_w = jax.random.normal(kw, (C, C, 3, 3), dtype=jnp.float32) / np.sqrt(fan_in)
    conv_b = jax.random.normal(kb, (C,), dtype=jnp.float32) * 0.1
    gamma = jnp.ones((C,), dtype=jnp.float32)   # GroupNorm default affine init
    beta = jnp.zeros((C,), dtype=jnp.float32)

    out = feature_aliasing(x, conv_w, conv_b, gamma, beta)
    out = jax.block_until_ready(out)

    ref = jax.block_until_ready(_reference(x, conv_w, conv_b, gamma, beta))
    assert out.shape == (B, C, H, W)
    np.testing.assert_allclose(np.asarray(out), np.asarray(ref), rtol=1e-4, atol=1e-4)

    print("KERNEL_OK")
</pallas_src>

<mosaic_0001>
module attributes {stable_mosaic.version = 11 : i64} {
  func.func @_feature_aliasing_kernel(%arg0: i32, %arg1: memref<1x36x256xf32, #tpu.memory_space<vmem>>, %arg2: memref<4x36xf32, #tpu.memory_space<vmem>>, %arg3: memref<4x1xf32, #tpu.memory_space<vmem>>, %arg4: memref<4x1xf32, #tpu.memory_space<vmem>>, %arg5: memref<4x1xf32, #tpu.memory_space<vmem>>, %arg6: memref<1x4x256xf32, #tpu.memory_space<vmem>>) attributes {dimension_semantics = [#tpu.dimension_semantics<parallel>], iteration_bounds = array<i64: 2>, scalar_prefetch = 0 : i64, scratch_operands = 0 : i64, tpu.core_type = #tpu.core_type<tc>, window_params = [{transform_indices = @transform_0, window_bounds = array<i64: 1, 36, 256>}, {pipeline_mode = #tpu.pipeline_mode<synchronous>, transform_indices = @transform_1, window_bounds = array<i64: 4, 36>}, {pipeline_mode = #tpu.pipeline_mode<synchronous>, transform_indices = @transform_2, window_bounds = array<i64: 4, 1>}, {pipeline_mode = #tpu.pipeline_mode<synchronous>, transform_indices = @transform_3, window_bounds = array<i64: 4, 1>}, {pipeline_mode = #tpu.pipeline_mode<synchronous>, transform_indices = @transform_4, window_bounds = array<i64: 4, 1>}, {transform_indices = @transform_5, window_bounds = array<i64: 1, 4, 256>}]} {
    %c0 = arith.constant 0 : index
    %c0_0 = arith.constant 0 : index
    %c0_1 = arith.constant 0 : index
    %0 = vector.load %arg1[%c0, %c0_0, %c0_1] : memref<1x36x256xf32, #tpu.memory_space<vmem>>, vector<1x36x256xf32>
    %1 = vector.shape_cast %0 : vector<1x36x256xf32> to vector<36x256xf32>
    %c0_2 = arith.constant 0 : index
    %c0_3 = arith.constant 0 : index
    %2 = vector.load %arg2[%c0_2, %c0_3] : memref<4x36xf32, #tpu.memory_space<vmem>>, vector<4x36xf32>
    %cst = arith.constant dense<0.000000e+00> : vector<4x256xf32>
    %3 = tpu.matmul %2, %1, %cst {dimension_numbers = #tpu.dot_dimension_numbers<[1], [0], [0], [1], [0, 0, 1, 1], [], []>} : vector<4x36xf32>, vector<36x256xf32>, vector<4x256xf32> -> vector<4x256xf32>
    %c0_4 = arith.constant 0 : index
    %c0_5 = arith.constant 0 : index
    %4 = vector.load %arg3[%c0_4, %c0_5] : memref<4x1xf32, #tpu.memory_space<vmem>>, vector<4x1xf32>
    %5 = vector.broadcast %4 : vector<4x1xf32> to vector<4x256xf32>
    %6 = arith.addf %3, %5 : vector<4x256xf32>
    %7 = vector.shape_cast %6 : vector<4x256xf32> to vector<1x4x256xf32>
    %cst_6 = arith.constant dense<0.000000e+00> : vector<1xf32>
    %8 = vector.multi_reduction <add>, %7, %cst_6 [1, 2] : vector<1x4x256xf32> to vector<1xf32>
    %9 = vector.shape_cast %8 : vector<1xf32> to vector<1x1x1xf32>
    %10 = vector.extract %9[0, 0, 0] : f32 from vector<1x1x1xf32>
    %11 = arith.mulf %6, %6 : vector<4x256xf32>
    %12 = vector.shape_cast %11 : vector<4x256xf32> to vector<1x4x256xf32>
    %cst_7 = arith.constant dense<0.000000e+00> : vector<1xf32>
    %13 = vector.multi_reduction <add>, %12, %cst_7 [1, 2] : vector<1x4x256xf32> to vector<1xf32>
    %14 = vector.shape_cast %13 : vector<1xf32> to vector<1x1x1xf32>
    %15 = vector.extract %14[0, 0, 0] : f32 from vector<1x1x1xf32>
    %cst_8 = arith.constant 1.024000e+03 : f32
    %16 = arith.divf %10, %cst_8 : f32
    %cst_9 = arith.constant 1.024000e+03 : f32
    %17 = arith.divf %15, %cst_9 : f32
    %18 = arith.mulf %16, %16 : f32
    %19 = arith.subf %17, %18 : f32
    %cst_10 = arith.constant 0.000000e+00 : f32
    %20 = arith.maximumf %19, %cst_10 : f32
    %cst_11 = arith.constant 9.99999974E-6 : f32
    %21 = arith.addf %20, %cst_11 : f32
    %22 = math.rsqrt %21 : f32
    %c0_12 = arith.constant 0 : index
    %c0_13 = arith.constant 0 : index
    %23 = vector.load %arg4[%c0_12, %c0_13] : memref<4x1xf32, #tpu.memory_space<vmem>>, vector<4x1xf32>
    %24 = vector.broadcast %22 : f32 to vector<4x1xf32>
    %25 = arith.mulf %23, %24 : vector<4x1xf32>
    %c0_14 = arith.constant 0 : index
    %c0_15 = arith.constant 0 : index
    %26 = vector.load %arg5[%c0_14, %c0_15] : memref<4x1xf32, #tpu.memory_space<vmem>>, vector<4x1xf32>
    %27 = vector.broadcast %16 : f32 to vector<4x1xf32>
    %28 = arith.mulf %27, %25 : vector<4x1xf32>
    %29 = arith.subf %26, %28 : vector<4x1xf32>
    %30 = vector.broadcast %25 : vector<4x1xf32> to vector<4x256xf32>
    %31 = arith.mulf %6, %30 : vector<4x256xf32>
    %32 = vector.broadcast %29 : vector<4x1xf32> to vector<4x256xf32>
    %33 = arith.addf %31, %32 : vector<4x256xf32>
    %cst_16 = arith.constant 5.000000e-01 : f32
    %34 = vector.broadcast %cst_16 : f32 to vector<4x256xf32>
    %35 = arith.mulf %34, %33 : vector<4x256xf32>
    %cst_17 = arith.constant 0.707106769 : f32
    %36 = vector.broadcast %cst_17 : f32 to vector<4x256xf32>
    %37 = arith.mulf %33, %36 : vector<4x256xf32>
    %38 = math.erf %37 : vector<4x256xf32>
    %cst_18 = arith.constant 1.000000e+00 : f32
    %39 = vector.broadcast %cst_18 : f32 to vector<4x256xf32>
    %40 = arith.addf %39, %38 : vector<4x256xf32>
    %41 = arith.mulf %35, %40 : vector<4x256xf32>
    %c0_19 = arith.constant 0 : index
    %c0_20 = arith.constant 0 : index
    %c0_21 = arith.constant 0 : index
    %42 = vector.load %arg6[%c0_19, %c0_20, %c0_21] : memref<1x4x256xf32, #tpu.memory_space<vmem>>, vector<1x4x256xf32>
    %43 = vector.shape_cast %42 : vector<1x4x256xf32> to vector<4x256xf32>
    %44 = vector.shape_cast %41 : vector<4x256xf32> to vector<1x4x256xf32>
    tpu.vector_store %arg6[%c0_19, %c0_20, %c0_21], %44 {strides = array<i32>} : memref<1x4x256xf32, #tpu.memory_space<vmem>>, vector<1x4x256xf32>,
    return
  }
  func.func @transform_0(%arg0: i32) -> (i32, i32, i32) {
    %c0_i32 = arith.constant 0 : i32
    %c0_i32_0 = arith.constant 0 : i32
    %c0_i32_1 = arith.constant 0 : i32
    return %arg0, %c0_i32, %c0_i32_0 : i32, i32, i32
  }
  func.func @transform_1(%arg0: i32) -> (i32, i32) {
    %c0_i32 = arith.constant 0 : i32
    %c0_i32_0 = arith.constant 0 : i32
    %c0_i32_1 = arith.constant 0 : i32
    return %c0_i32, %c0_i32_0 : i32, i32
  }
  func.func @transform_2(%arg0: i32) -> (i32, i32) {
    %c0_i32 = arith.constant 0 : i32
    %c0_i32_0 = arith.constant 0 : i32
    %c0_i32_1 = arith.constant 0 : i32
    return %c0_i32, %c0_i32_0 : i32, i32
  }
  func.func @transform_3(%arg0: i32) -> (i32, i32) {
    %c0_i32 = arith.constant 0 : i32
    %c0_i32_0 = arith.constant 0 : i32
    %c0_i32_1 = arith.constant 0 : i32
    return %c0_i32, %c0_i32_0 : i32, i32
  }
  func.func @transform_4(%arg0: i32) -> (i32, i32) {
    %c0_i32 = arith.constant 0 : i32
    %c0_i32_0 = arith.constant 0 : i32
    %c0_i32_1 = arith.constant 0 : i32
    return %c0_i32, %c0_i32_0 : i32, i32
  }
  func.func @transform_5(%arg0: i32) -> (i32, i32, i32) {
    %c0_i32 = arith.constant 0 : i32
    %c0_i32_0 = arith.constant 0 : i32
    %c0_i32_1 = arith.constant 0 : i32
    return %arg0, %c0_i32, %c0_i32_0 : i32, i32, i32
  }
}

</mosaic_0001>

<llo_original>
// kernel: feature_aliasing.1
$region0: #{feature_aliasing.1}
  #allocation0 [shape = 'u32[]', space=smem, size = 0x4, offset = 0x4, fixed_abs, tag = 'smem constant byte address 0x4 - core index']
  #allocation1 [shape = 'u32[72,128]{1,0:T(1,128)}', space=vmem, size = 0x9000, scoped, tag = 'internal scratch']
  %s0 = inlined_call_operand.vmem [shape: f32[2,36,256], index: 0, kind: input, shape index: {}]
  %s1 = inlined_call_operand.vmem [shape: f32[4,36], index: 1, kind: input, shape index: {}]
  %s2 = inlined_call_operand.vmem [shape: f32[4,1], index: 2, kind: input, shape index: {}]
  %s3 = inlined_call_operand.vmem [shape: f32[4,1], index: 3, kind: input, shape index: {}]
  %s4 = inlined_call_operand.vmem [shape: f32[4,1], index: 4, kind: input, shape index: {}]
  %s5 = inlined_call_operand.vmem [shape: f32[2,4,256], index: 5, kind: output, shape index: {}]
  %s6 = sld [smem:[#allocation0]]
  $region53: #{feature_aliasing.1} parent=0
    _
  %s8 = ssub.s32 1, %s6
  %s9 = scalar_select 0, %s8, %s6
  loop: start=0, step=1, limit=4
  $region2: #{feature_aliasing.1} parent=0 // loop_pre_header
    _
  $region3: #{feature_aliasing.1} parent=0 // loop_header
    %s11 = sphi 0, %s15
    %p12 = scmp.ge.s32.totalorder %s11, 4
    %s21 = sphi 0, %s23
    %s24 = sphi 0, %s21
    %s25 = sphi 0, %s24
    %s41 = sphi 0, %s25
    %s45 = sphi 0, %s45
    %s47 = sphi 0, %s45
    %s48 = sphi 0, %s47
    %s62 = sphi 0, %s48
    %s66 = sphi 0, %s66
    %s68 = sphi 0, %s66
    %s69 = sphi 0, %s68
    %s83 = sphi 0, %s69
    %s87 = sphi 0, %s87
    %s89 = sphi 0, %s87
    %s90 = sphi 0, %s89
    %s104 = sphi 0, %s90
    %s108 = sphi 0, %s108
    %s110 = sphi 0, %s108
    %s111 = sphi 0, %s110
    %s125 = sphi 0, %s111
    %s131 = sphi 0, %s133
    %s134 = sphi 0, %s131
    %s135 = sphi 0, %s134
    %s151 = sphi 0, %s135
  $region4: #{feature_aliasing.1} parent=0 // loop_header_branch
    %14 = sbr.rel (%p12) target = $region8
  $region5: #{feature_aliasing.1} parent=0 // loop_body
    %s16 = ssub.s32 %s11, 1
    %s17 = ssub.s32 %s11, 2
    %s18 = sadd.s32 %s11, 1
    %s19 = ssub.s32 %s11, %s18
    %p20 = scmp.eq.s32.totalorder %s19, 0
    %s22 = sadd.s32 %s21, 1
    %s23 = scalar_select %p20, %s21, %s22
    %p26 = pneg %p20
    %p27 = scmp.eq.s32.totalorder %s11, 1
    %p28 = por %p26, %p27
    %p29 = scmp.ne.s32.totalorder %s21, %s24
    %p30 = scmp.eq.s32.totalorder %s11, 0
    %p31 = por %p29, %p30
    %p32 = scmp.ne.s32.totalorder %s21, %s24
    %p33 = scmp.eq.s32.totalorder %s16, 1
    %p34 = por %p32, %p33
    %p35 = scmp.ne.s32.totalorder %s24, %s25
    %p36 = scmp.eq.s32.totalorder %s16, 0
    %p37 = por %p35, %p36
    %p38 = scmp.ne.s32.totalorder %s24, %s25
    %p39 = scmp.eq.s32.totalorder %s17, 1
    %p40 = por %p38, %p39
    %p42 = scmp.ne.s32.totalorder %s25, %s41
    %p43 = scmp.eq.s32.totalorder %s17, 0
    %p44 = por %p42, %p43
    %s46 = sadd.s32 %s45, 1
    %p49 = scmp.eq.s32.totalorder %s11, 1
    %p50 = scmp.ne.s32.totalorder %s45, %s47
    %p51 = scmp.eq.s32.totalorder %s11, 0
    %p52 = por %p50, %p51
    %p53 = scmp.ne.s32.totalorder %s45, %s47
    %p54 = scmp.eq.s32.totalorder %s16, 1
    %p55 = por %p53, %p54
    %p56 = scmp.ne.s32.totalorder %s47, %s48
    %p57 = scmp.eq.s32.totalorder %s16, 0
    %p58 = por %p56, %p57
    %p59 = scmp.ne.s32.totalorder %s47, %s48
    %p60 = scmp.eq.s32.totalorder %s17, 1
    %p61 = por %p59, %p60
    %p63 = scmp.ne.s32.totalorder %s48, %s62
    %p64 = scmp.eq.s32.totalorder %s17, 0
    %p65 = por %p63, %p64
    %s67 = sadd.s32 %s66, 1
    %p70 = scmp.eq.s32.totalorder %s11, 1
    %p71 = scmp.ne.s32.totalorder %s66, %s68
    %p72 = scmp.eq.s32.totalorder %s11, 0
    %p73 = por %p71, %p72
    %p74 = scmp.ne.s32.totalorder %s66, %s68
    %p75 = scmp.eq.s32.totalorder %s16, 1
    %p76 = por %p74, %p75
    %p77 = scmp.ne.s32.totalorder %s68, %s69
    %p78 = scmp.eq.s32.totalorder %s16, 0
    %p79 = por %p77, %p78
    %p80 = scmp.ne.s32.totalorder %s68, %s69
    %p81 = scmp.eq.s32.totalorder %s17, 1
    %p82 = por %p80, %p81
    %p84 = scmp.ne.s32.totalorder %s69, %s83
    %p85 = scmp.eq.s32.totalorder %s17, 0
    %p86 = por %p84, %p85
    %s88 = sadd.s32 %s87, 1
    %p91 = scmp.eq.s32.totalorder %s11, 1
    %p92 = scmp.ne.s32.totalorder %s87, %s89
    %p93 = scmp.eq.s32.totalorder %s11, 0
    %p94 = por %p92, %p93
    %p95 = scmp.ne.s32.totalorder %s87, %s89
    %p96 = scmp.eq.s32.totalorder %s16, 1
    %p97 = por %p95, %p96
    %p98 = scmp.ne.s32.totalorder %s89, %s90
    %p99 = scmp.eq.s32.totalorder %s16, 0
    %p100 = por %p98, %p99
    %p101 = scmp.ne.s32.totalorder %s89, %s90
    %p102 = scmp.eq.s32.totalorder %s17, 1
    %p103 = por %p101, %p102
    %p105 = scmp.ne.s32.totalorder %s90, %s104
    %p106 = scmp.eq.s32.totalorder %s17, 0
    %p107 = por %p105, %p106
    %s109 = sadd.s32 %s108, 1
    %p112 = scmp.eq.s32.totalorder %s11, 1
    %p113 = scmp.ne.s32.totalorder %s108, %s110
    %p114 = scmp.eq.s32.totalorder %s11, 0
    %p115 = por %p113, %p114
    %p116 = scmp.ne.s32.totalorder %s108, %s110
    %p117 = scmp.eq.s32.totalorder %s16, 1
    %p118 = por %p116, %p117
    %p119 = scmp.ne.s32.totalorder %s110, %s111
    %p120 = scmp.eq.s32.totalorder %s16, 0
    %p121 = por %p119, %p120
    %p122 = scmp.ne.s32.totalorder %s110, %s111
    %p123 = scmp.eq.s32.totalorder %s17, 1
    %p124 = por %p122, %p123
    %p126 = scmp.ne.s32.totalorder %s111, %s125
    %p127 = scmp.eq.s32.totalorder %s17, 0
    %p128 = por %p126, %p127
    %s129 = ssub.s32 %s11, %s18
    %p130 = scmp.eq.s32.totalorder %s129, 0
    %s132 = sadd.s32 %s131, 1
    %s133 = scalar_select %p130, %s131, %s132
    %p136 = pneg %p130
    %p137 = scmp.eq.s32.totalorder %s11, 1
    %p138 = por %p136, %p137
    %p139 = scmp.ne.s32.totalorder %s131, %s134
    %p140 = scmp.eq.s32.totalorder %s11, 0
    %p141 = por %p139, %p140
    %p142 = scmp.ne.s32.totalorder %s131, %s134
    %p143 = scmp.eq.s32.totalorder %s16, 1
    %p144 = por %p142, %p143
    %p145 = scmp.ne.s32.totalorder %s134, %s135
    %p146 = scmp.eq.s32.totalorder %s16, 0
    %p147 = por %p145, %p146
    %p148 = scmp.ne.s32.totalorder %s134, %s135
    %p149 = scmp.eq.s32.totalorder %s17, 1
    %p150 = por %p148, %p149
    %p152 = scmp.ne.s32.totalorder %s135, %s151
    %p153 = scmp.eq.s32.totalorder %s17, 0
    %p154 = por %p152, %p153
    %p155 = scmp.le.s32.totalorder 1, %s11
    %p156 = scmp.lt.s32.totalorder %s11, 3
    %p157 = pnand %p155, %p156
    %p158 = pneg %p157
    // Predicated region
    $region9: #{feature_aliasing.1} parent=5 // pred_check
      _
    $region10: #{feature_aliasing.1} parent=5 // pred_check_branch
      %160 = sbr.rel (%p157) target = $region12
    $region11: #{feature_aliasing.1} parent=5 // pred_region
      %s161 = ssub.s32 %s11, 1
      // Predicated region
      $region13: #{feature_aliasing.1} parent=11 // pred_check
        %p162 = pneg %p58
      $region14: #{feature_aliasing.1} parent=11 // pred_check_branch
        %164 = sbr.rel (%p162) target = $region16
      $region15: #{feature_aliasing.1} parent=11 // pred_region
        _
      $region16: #{feature_aliasing.1} parent=11 // pred_fallthru
        _
      // Predicated region
      $region17: #{feature_aliasing.1} parent=11 // pred_check
        %p165 = pneg %p79
      $region18: #{feature_aliasing.1} parent=11 // pred_check_branch
        %167 = sbr.rel (%p165) target = $region20
      $region19: #{feature_aliasing.1} parent=11 // pred_region
        _
      $region20: #{feature_aliasing.1} parent=11 // pred_fallthru
        _
      // Predicated region
      $region21: #{feature_aliasing.1} parent=11 // pred_check
        %p168 = pneg %p100
      $region22: #{feature_aliasing.1} parent=11 // pred_check_branch
        %170 = sbr.rel (%p168) target = $region24
      $region23: #{feature_aliasing.1} parent=11 // pred_region
        _
      $region24: #{feature_aliasing.1} parent=11 // pred_fallthru
        _
      // Predicated region
      $region25: #{feature_aliasing.1} parent=11 // pred_check
        %p171 = pneg %p121
      $region26: #{feature_aliasing.1} parent=11 // pred_check_branch
        %173 = sbr.rel (%p171) target = $region28
      $region27: #{feature_aliasing.1} parent=11 // pred_region
        _
      $region28: #{feature_aliasing.1} parent=11 // pred_fallthru
        _
    $region12: #{feature_aliasing.1} parent=5 // pred_fallthru
      _
    %p174 = scmp.lt.s32.totalorder %s11, 2
    // Predicated region
    $region29: #{feature_aliasing.1} parent=5 // pred_check
      %p175 = pneg %p174
    $region30: #{feature_aliasing.1} parent=5 // pred_check_branch
      %177 = sbr.rel (%p175) target = $region32
    $region31: #{feature_aliasing.1} parent=5 // pred_region
      // Predicated region
      $region33: #{feature_aliasing.1} parent=31 // pred_check
        %p178 = pneg %p31
      $region34: #{feature_aliasing.1} parent=31 // pred_check_branch
        %180 = sbr.rel (%p178) target = $region36
      $region35: #{feature_aliasing.1} parent=31 // pred_region
        %p181 = scmp.lt.s32.totalorder %s11, 1
        %s182 = scalar_select %p181, %s11, 1
        %s183 = smul.addr %s182, 10
        %s184 = smul.addr %s183, 8
        %s185 = scalar_lea.vmem %s0, %s184
      $region36: #{feature_aliasing.1} parent=31 // pred_fallthru
        _
    $region32: #{feature_aliasing.1} parent=5 // pred_fallthru
      _
    %p186 = scmp.le.s32.totalorder 1, %s11
    %p187 = scmp.lt.s32.totalorder %s11, 3
    %p188 = pnand %p186, %p187
    %p189 = pneg %p188
    // Predicated region
    $region37: #{feature_aliasing.1} parent=5 // pred_check
      _
    $region38: #{feature_aliasing.1} parent=5 // pred_check_branch
      %191 = sbr.rel (%p188) target = $region40
    $region39: #{feature_aliasing.1} parent=5 // pred_region
      %s192 = ssub.s32 %s11, 1
      %p193 = scmp.lt.s32.totalorder %s16, 1
      %s194 = scalar_select %p193, %s16, 1
      %s195 = smul.addr %s194, 10
      %s196 = smul.addr %s195, 8
      %s197 = scalar_lea.vmem %s0, %s196
      %p198 = pneg %p37
      %p199 = pneg %p34
      %p200 = pneg %p58
      %p201 = pneg %p55
      %p202 = pneg %p79
      %p203 = pneg %p76
      %p204 = pneg %p100
      %p205 = pneg %p97
      %p206 = pneg %p121
      %p207 = pneg %p118
      %p208 = pneg %p147
      %p209 = pneg %p144
      %p210 = scmp.lt.s32.totalorder %s16, 1
      %s211 = scalar_select %p210, %s16, 1
      %s212 = smul.addr %s211, 2
      %s213 = smul.addr %s212, 4
      %s214 = scalar_lea.vmem %s5, %s213
      %p215 = scmp.lt.s32.totalorder %s16, 1
      %s216 = scalar_select %p215, %s16, 1
      %s217 = smul.addr %s216, 10
      %s218 = smul.addr %s217, 8
      %s219 = scalar_lea.vmem %s0, %s218
      %p220 = scmp.lt.s32.totalorder %s16, 1
      %s221 = scalar_select %p220, %s16, 1
      %s222 = smul.addr %s221, 2
      %s223 = smul.addr %s222, 4
      %s224 = scalar_lea.vmem %s5, %s223
      %v225 = vld [vmem:[%s219] sm:$0xff]
      %v226 = vld [vmem:[%s219 + $0x8] sm:$0xff]
      %v227 = vld [vmem:[%s219 + $0x10] sm:$0xff]
      %v228 = vld [vmem:[%s219 + $0x18] sm:$0xff]
      %v229 = vld [vmem:[%s219 + $0x20] sm:$0xff]
      %v230 = vld [vmem:[%s219 + $0x28] sm:$0xff]
      %v231 = vld [vmem:[%s219 + $0x30] sm:$0xff]
      %v232 = vld [vmem:[%s219 + $0x38] sm:$0xff]
      %v233 = vld [vmem:[%s219 + $0x40] sm:$0xf]
      %v234 = vld [vmem:[%s219 + $0x48] sm:$0xf]
      %v235 = vld [vmem:[%s1] sm:$0xf]
      %v236 = vld [vmem:[%s2] sm:$0xf]
      %238 = vset.pattern.permute.xlu0 0
      %239 = vperm.xlu0 %238, %v236
      %v240 = vpop.permute.xlu0 %239
      %vm242 = vcmask 293888
      %v244 = vsel %vm242, %v235, 0
      %vm246 = vcmask 1043456
      %v248 = vsel %vm246, %v233, 0
      %v251 = vsel %vm246, %v234, 0
      %253 = vmatpush.msra.mxu0 0.0
      %254 = vmatpush.msra.mxu0 0.0
      %255 = vmatpush.msra.mxu0 0.0
      %256 = vmatpush.msra.mxu0 0.0
      %257 = vmatpush.msra.mxu0 0.0
      %258 = vmatpush.msra.mxu0 0.0
      %259 = vmatpush.msra.mxu0 0.0
      %260 = vmatpush.msra.mxu0 0.0
      %261 = vmatpush.msra.mxu0 0.0
      %262 = vmatpush.msra.mxu0 0.0
      %263 = vmatpush.msra.mxu0 0.0
      %264 = vmatpush.msra.mxu0 %v248
      %265 = vmatpush.msra.mxu0 %v231
      %266 = vmatpush.msra.mxu0 %v229
      %267 = vmatpush.msra.mxu0 %v227
      %268 = vmatpush.msra.mxu0 %v225
      %269 = vmatmul.f32.gmra.mxu0 %v244
      %v270 = vpop.f32.mrf.mxu0
      %v271 = vadd.f32 %v240, %v270
      %272 = vdwg.mxu0
      %273 = vmatpush.msra.mxu0 0.0
      %274 = vmatpush.msra.mxu0 0.0
      %275 = vmatpush.msra.mxu0 0.0
      %276 = vmatpush.msra.mxu0 0.0
      %277 = vmatpush.msra.mxu0 0.0
      %278 = vmatpush.msra.mxu0 0.0
      %279 = vmatpush.msra.mxu0 0.0
      %280 = vmatpush.msra.mxu0 0.0
      %281 = vmatpush.msra.mxu0 0.0
      %282 = vmatpush.msra.mxu0 0.0
      %283 = vmatpush.msra.mxu0 0.0
      %284 = vmatpush.msra.mxu0 %v251
      %285 = vmatpush.msra.mxu0 %v232
      %286 = vmatpush.msra.mxu0 %v230
      %287 = vmatpush.msra.mxu0 %v228
      %288 = vmatpush.msra.mxu0 %v226
      %289 = vmatmul.f32.gmra.mxu0 %v244
      %v290 = vpop.f32.mrf.mxu0
      %v291 = vadd.f32 %v240, %v290
      %292 = vdwg.mxu0
      %v293 = vsel %vm246, %v271, 0.0
      %v294 = vsel %vm246, %v291, 0.0
      %v295 = vadd.f32 %v293, %v294
      %296 = vadd.xlane.f32.xlu0 %v295
      %v297 = vpop.xlane.xlu0 %296
      %v298 = vrot.slane %v297, 4
      %v299 = vadd.f32 %v297, %v298
      %v300 = vrot.slane %v299, 2
      %v301 = vadd.f32 %v299, %v300
      %v302 = vrot.slane %v301, 1
      %v303 = vadd.f32 %v301, %v302
      %s304 = vtos %v303
      %v305 = vmul.f32 %v271, %v271
      %v306 = vmul.f32 %v291, %v291
      %v307 = vsel %vm246, %v305, 0.0
      %v308 = vsel %vm246, %v306, 0.0
      %v309 = vadd.f32 %v307, %v308
      %310 = vadd.xlane.f32.xlu0 %v309
      %v311 = vpop.xlane.xlu0 %310
      %v312 = vrot.slane %v311, 4
      %v313 = vadd.f32 %v311, %v312
      %v314 = vrot.slane %v313, 2
      %v315 = vadd.f32 %v313, %v314
      %v316 = vrot.slane %v315, 1
      %v317 = vadd.f32 %v315, %v316
      %s318 = vtos %v317
      %v319 = vrcp.pop 1024.0
      %v320 = vmul.f32 1024.0, %v319
      %v321 = vsub.f32 1.0, %v320
      %v322 = vmul.f32 %v319, %v321
      %v323 = vadd.f32 %v319, %v322
      %vm324 = vweird.f32 %v319
      %v325 = vsel %vm324, %v319, %v323
      %s326 = vtos %v325
      %s327 = smul.f32 %s304, %s326
      %v328 = vrcp.pop 1024.0
      %v329 = vmul.f32 1024.0, %v328
      %v330 = vsub.f32 1.0, %v329
      %v331 = vmul.f32 %v328, %v330
      %v332 = vadd.f32 %v328, %v331
      %vm333 = vweird.f32 %v328
      %v334 = vsel %vm333, %v328, %v332
      %s335 = vtos %v334
      %s336 = smul.f32 %s318, %s335
      %s337 = smul.f32 %s327, %s327
      %s338 = ssub.f32 %s336, %s337
      %s339 = smax.f32 %s338, 0.0
      %s340 = sadd.f32 %s339, 1e-05
      %v341 = vstv %s340
      %v342 = vrsqrt.pop %v341
      %v343 = vmul.f32 %v342, %v341
      %v344 = vmul.f32 %v343, %v342
      %v345 = vmul.f32 0.5, %v344
      %v346 = vsub.f32 1.5, %v345
      %v347 = vmul.f32 %v342, %v346
      %vm348 = vweird.f32 %v341
      %vm349 = vweird.f32 %v342
      %vm350 = vmor %vm348, %vm349
      %v351 = vsel %vm350, %v342, %v347
      %s352 = vtos %v351
      %v353 = vld [vmem:[%s3] sm:$0xf]
      %v354 = vstv %s352
      %v355 = vmul.f32 %v353, %v354
      %v356 = vld [vmem:[%s4] sm:$0xf]
      %v357 = vstv %s327
      %v358 = vmul.f32 %v357, %v355
      %v359 = vsub.f32 %v356, %v358
      %361 = vset.pattern.permute.xlu0 0
      %362 = vperm.xlu0 %361, %v355
      %v363 = vpop.permute.xlu0 %362
      %v365 = vmul.f32 %v271, %v363
      %v366 = vmul.f32 %v291, %v363
      %368 = vset.pattern.permute.xlu0 0
      %369 = vperm.xlu0 %368, %v359
      %v370 = vpop.permute.xlu0 %369
      %v372 = vadd.f32 %v365, %v370
      %v373 = vadd.f32 %v366, %v370
      %v374 = vmul.f32 %v372, 0.5
      %v375 = vmul.f32 %v373, 0.5
      %v376 = vmul.f32 %v372, 0.70710677
      %v377 = vmul.f32 %v373, 0.70710677
      %v378 = vmul.f32 %v376, %v376
      %v379 = vmin.f32 16.0, %v378
      %v380 = vmul.f32 %v379, 2.1237322e-06
      %v381 = vadd.f32 %v380, 0.00028619796
      %v382 = vmul.f32 %v379, %v381
      %v383 = vadd.f32 %v382, 0.0036580483
      %v384 = vmul.f32 %v379, %v383
      %v385 = vadd.f32 %v384, 0.05243302
      %v386 = vmul.f32 %v379, %v385
      %v387 = vadd.f32 %v386, 0.18741608
      %v388 = vmul.f32 %v379, %v387
      %v389 = vadd.f32 %v388, 1.1283791
      %v390 = vmul.f32 %v376, %v389
      %v391 = vmul.f32 %v379, 3.8918573e-05
      %v392 = vadd.f32 %v391, 0.001143296
      %v393 = vmul.f32 %v379, %v392
      %v394 = vadd.f32 %v393, 0.014752088
      %v395 = vmul.f32 %v379, %v394
      %v396 = vadd.f32 %v395, 0.112945676
      %v397 = vmul.f32 %v379, %v396
      %v398 = vadd.f32 %v397, 0.4994258
      %v399 = vmul.f32 %v379, %v398
      %v400 = vadd.f32 %v399, 1.0
      %v401 = vrcp.pop %v400
      %v402 = vmul.f32 %v400, %v401
      %v403 = vsub.f32 1.0, %v402
      %v404 = vmul.f32 %v401, %v403
      %v405 = vadd.f32 %v401, %v404
      %vm406 = vweird.f32 %v400
      %vm407 = vweird.f32 %v401
      %vm408 = vmor %vm406, %vm407
      %v409 = vsel %vm408, %v401, %v405
      %v410 = vand.u32 2147483647, %v400
      %vm411 = vcmp.eq.f32.partialorder %v410, 8.507059e+37
      %v412 = vand.u32 %v400, 2147483648
      %v413 = vor.u32 1.1754944e-38, %v412
      %v414 = vsel %vm411, %v413, %v409
      %v415 = vmul.f32 %v390, %v414
      %v416 = vmin.f32 %v415, 1.0
      %v417 = vmax.f32 %v416, -1.0
      %v418 = vmul.f32 %v377, %v377
      %v419 = vmin.f32 16.0, %v418
      %v420 = vmul.f32 %v419, 2.1237322e-06
      %v421 = vadd.f32 %v420, 0.00028619796
      %v422 = vmul.f32 %v419, %v421
      %v423 = vadd.f32 %v422, 0.0036580483
      %v424 = vmul.f32 %v419, %v423
      %v425 = vadd.f32 %v424, 0.05243302
      %v426 = vmul.f32 %v419, %v425
      %v427 = vadd.f32 %v426, 0.18741608
      %v428 = vmul.f32 %v419, %v427
      %v429 = vadd.f32 %v428, 1.1283791
      %v430 = vmul.f32 %v377, %v429
      %v431 = vmul.f32 %v419, 3.8918573e-05
      %v432 = vadd.f32 %v431, 0.001143296
      %v433 = vmul.f32 %v419, %v432
      %v434 = vadd.f32 %v433, 0.014752088
      %v435 = vmul.f32 %v419, %v434
      %v436 = vadd.f32 %v435, 0.112945676
      %v437 = vmul.f32 %v419, %v436
      %v438 = vadd.f32 %v437, 0.4994258
      %v439 = vmul.f32 %v419, %v438
      %v440 = vadd.f32 %v439, 1.0
      %v441 = vrcp.pop %v440
      %v442 = vmul.f32 %v440, %v441
      %v443 = vsub.f32 1.0, %v442
      %v444 = vmul.f32 %v441, %v443
      %v445 = vadd.f32 %v441, %v444
      %vm446 = vweird.f32 %v440
      %vm447 = vweird.f32 %v441
      %vm448 = vmor %vm446, %vm447
      %v449 = vsel %vm448, %v441, %v445
      %v450 = vand.u32 2147483647, %v440
      %vm451 = vcmp.eq.f32.partialorder %v450, 8.507059e+37
      %v452 = vand.u32 %v440, 2147483648
      %v453 = vor.u32 1.1754944e-38, %v452
      %v454 = vsel %vm451, %v453, %v449
      %v455 = vmul.f32 %v430, %v454
      %v456 = vmin.f32 %v455, 1.0
      %v457 = vmax.f32 %v456, -1.0
      %v458 = vadd.f32 %v417, 1.0
      %v459 = vadd.f32 %v457, 1.0
      %v460 = vmul.f32 %v374, %v458
      %v461 = vmul.f32 %v375, %v459
      %v464 = vrot.slane %v461, 4
      %v465 = vsel %vm246, %v460, %v464
      %467 = vst [vmem:[%s224] sm:$0xff] %v465
      %p468 = scmp.lt.s32.totalorder %s16, 1
      %s469 = scalar_select %p468, %s16, 1
      %s470 = smul.addr %s469, 2
      %s471 = smul.addr %s470, 4
      %s472 = scalar_lea.vmem %s5, %s471
      // Predicated region
      $region41: #{feature_aliasing.1} parent=39 // pred_check
        %p473 = pneg %p144
      $region42: #{feature_aliasing.1} parent=39 // pred_check_branch
        %475 = sbr.rel (%p473) target = $region44
      $region43: #{feature_aliasing.1} parent=39 // pred_region
        _
      $region44: #{feature_aliasing.1} parent=39 // pred_fallthru
        _
    $region40: #{feature_aliasing.1} parent=5 // pred_fallthru
      _
    %p476 = scmp.le.s32.totalorder 2, %s11
    // Predicated region
    $region45: #{feature_aliasing.1} parent=5 // pred_check
      %p477 = pneg %p476
    $region46: #{feature_aliasing.1} parent=5 // pred_check_branch
      %479 = sbr.rel (%p477) target = $region48
    $region47: #{feature_aliasing.1} parent=5 // pred_region
      %s480 = ssub.s32 %s11, 2
      // Predicated region
      $region49: #{feature_aliasing.1} parent=47 // pred_check
        %p481 = pneg %p150
      $region50: #{feature_aliasing.1} parent=47 // pred_check_branch
        %483 = sbr.rel (%p481) target = $region52
      $region51: #{feature_aliasing.1} parent=47 // pred_region
        %p484 = scmp.lt.s32.totalorder %s17, 1
        %s485 = scalar_select %p484, %s17, 1
        %s486 = smul.addr %s485, 2
        %s487 = smul.addr %s486, 4
        %s488 = scalar_lea.vmem %s5, %s487
      $region52: #{feature_aliasing.1} parent=47 // pred_fallthru
        _
    $region48: #{feature_aliasing.1} parent=5 // pred_fallthru
      _
  $region6: #{feature_aliasing.1} parent=0 // loop_footer
    %s15 = sadd.s32 1, %s11
  $region7: #{feature_aliasing.1} parent=0 // loop_footer_branch
    %10 = sbr.rel target = $region3
  $region8: #{feature_aliasing.1} parent=0 // loop_exit
    _

</llo_original>
